<compile_context>
chip_gen: v7x
topology: tpu7x:2x2x1
jax: 0.10.0
libtpu: 0.0.40
codegen_flags: <defaults>
</compile_context>

<pallas_src>
import functools
import math

import jax
import jax.numpy as jnp
from jax import lax
from jax.experimental import pallas as pl
from jax.experimental.pallas import tpu as pltpu


def _round_up(x, m):
    return ((x + m - 1) // m) * m


@functools.partial(jax.jit, static_argnames=("tile_b",))
def routeur_forward(x, weight, bias=None, *, tile_b=1024):
    """Forward pass of Routeur.

    x:      (B, context_length, embedding_dim) float32
    weight: (N, D) float32  -- torch-native nn.Linear weight, N = nb_of_blocks + 1
    bias:   (N,)   float32  -- accepted for API fidelity; mathematically a no-op
                               for softmax(dim=0) -> argmax(dim=1), so not used. [R9]
    returns int32 (B,) = argmax(dim=1) of softmax(dim=0)(flatten(x) @ W.T + b)
    """
    del bias  # exact cancellation: score[b,n] = (L+b)[b,n] - (b[n] + lse[n]) = L[b,n] - lse[n]

    B = x.shape[0]
    N, D = weight.shape
    x2d = x.reshape(B, D)                       # torch.flatten(X, start_dim=1)

    # Lane-dense batch tiles (multiple of 128).  [R4] default tile_b >= 1024.
    tb = max(128, min(_round_up(tile_b, 128), _round_up(B, 128)))
    n_tiles = (B + tb - 1) // tb                # [R1] no host-side pad of x
    b_pad = n_tiles * tb                        # output stays 128-aligned (unmasked stores)
    needs_mask = (B % tb) != 0                  # [R8] static gate on the pad-lane mask

    def kernel(x_ref, w_ref, o_ref, logits_sc, m_sc, s_sc):
        i = pl.program_id(0)

        @pl.when(i == 0)
        def _():
            m_sc[...] = jnp.full_like(m_sc, -jnp.inf)
            s_sc[...] = jnp.zeros_like(s_sc)

        # logits^T = W @ X_tile^T : (N, D) x (TB, D) -> (N, TB), f32 accumulation.
        # N sits on the f32 sublanes, batch is lane-dense (transpose-free off the MXU).
        lt = lax.dot_general(
            w_ref[...], x_ref[...],
            dimension_numbers=(((1,), (1,)), ((), ())),
            preferred_element_type=jnp.float32)

        if needs_mask:
            # [R1] the trailing block is partial; garbage lanes (which may be NaN/Inf)
            # are forced to -inf *after* the matmul and *before* any reduction/store,
            # so they never affect the column (dim=0) statistics.
            lane = lax.broadcasted_iota(jnp.int32, lt.shape, 1) + i * tb
            lt = jnp.where(lane < B, lt, -jnp.inf)

        # [R2] keep the logits tile resident in VMEM for the fused epilogue.
        logits_sc[i] = lt

        # Online logsumexp over the batch (lane) axis, per column n.
        tile_max = jnp.max(lt, axis=1, keepdims=True)                  # (N, 1)
        m_new = jnp.maximum(m_sc[...], tile_max)
        s_sc[...] = (s_sc[...] * jnp.exp(m_sc[...] - m_new)
                     + jnp.sum(jnp.exp(lt - m_new), axis=1, keepdims=True))
        m_sc[...] = m_new

        # [R2] fused epilogue: lse + per-lane argmax straight from VMEM scratch.
        @pl.when(i == pl.num_programs(0) - 1)
        def _():
            lse = m_sc[...] + jnp.log(s_sc[...])                       # (N, 1)

            def tile_argmax(t, carry):
                score = logits_sc[t] - lse                             # (N, tb)
                # Padded lanes are -inf in every row; -inf == -inf (IEEE) picks index 0
                # for them, and those lanes are sliced off in the wrapper.
                best = jnp.max(score, axis=0, keepdims=True)           # (1, tb)
                ids = lax.broadcasted_iota(jnp.int32, score.shape, 0)
                o_ref[pl.ds(t, 1), :] = jnp.min(
                    jnp.where(score == best, ids, N),
                    axis=0, keepdims=True).astype(jnp.int32)           # first max
                return carry

            lax.fori_loop(0, n_tiles, tile_argmax, 0)

    # [R3] explicit VMEM budget (v7x: 64 MiB physical / 32 MiB scoped default).
    x_buf = 2 * tb * D * 4                       # double-buffered x tile
    w_buf = 2 * N * D * 4                        # resident weight (conservative)
    logits_buf = n_tiles * _round_up(N, 8) * tb * 4
    out_buf = _round_up(n_tiles, 8) * tb * 4
    need = x_buf + w_buf + logits_buf + out_buf + (2 << 20)
    vmem_limit = int(min(max(32 << 20, int(need * 1.25)), 48 << 20))

    idx2d = pl.pallas_call(
        kernel,
        out_shape=jax.ShapeDtypeStruct((n_tiles, tb), jnp.int32),
        grid_spec=pltpu.PrefetchScalarGridSpec(
            num_scalar_prefetch=0,
            grid=(n_tiles,),
            in_specs=[
                # x tile, auto-pipelined HBM->VMEM.  If a profile still shows exposed
                # DMA at large tiles, add pipeline_mode=pl.Buffered(3) here. [R7]
                pl.BlockSpec((tb, D), lambda i: (i, 0)),
                pl.BlockSpec((N, D), lambda i: (0, 0)),    # weight (resident)
            ],
            # Resident output block, written once in the epilogue.
            out_specs=pl.BlockSpec((n_tiles, tb), lambda i: (0, 0)),
            scratch_shapes=[
                pltpu.VMEM((n_tiles, N, tb), jnp.float32),  # logits^T tiles [R2]
                pltpu.VMEM((N, 1), jnp.float32),            # running max
                pltpu.VMEM((N, 1), jnp.float32),            # running sum
            ],
        ),
        compiler_params=pltpu.CompilerParams(
            # lse / logits scratch accumulate across the batch grid axis.
            dimension_semantics=("arbitrary",),
            vmem_limit_bytes=vmem_limit,
        ),
    )(x2d, weight)

    return idx2d.reshape(b_pad)[:B]


if __name__ == "__main__":
    # config: context_length=8, embedding_dim=32, nb_of_blocks=7
    B, C, E = 200, 8, 32          # batch chosen so the demo grid has a partial tile
    N = 7 + 1
    D = C * E

    key = jax.random.PRNGKey(0)
    kx, kw, kb = jax.random.split(key, 3)
    x = jax.random.normal(kx, (B, C, E), dtype=jnp.float32)

    # Deterministic nn.Linear-style init (uniform +/- 1/sqrt(fan_in)); torch layout (N, D).
    bound = 1.0 / math.sqrt(D)
    weight = jax.random.uniform(kw, (N, D), minval=-bound, maxval=bound, dtype=jnp.float32)
    bias = jax.random.uniform(kb, (N,), minval=-bound, maxval=bound, dtype=jnp.float32)

    # Pure-JAX reference of the module semantics (Linear -> Softmax(dim=0) -> argmax(dim=1)).
    x2d = x.reshape(B, D)
    logits = jnp.matmul(x2d, weight.T, precision=lax.Precision.HIGHEST) + bias
    probs = jax.nn.softmax(logits, axis=0)
    ref = jnp.argmax(probs, axis=1).astype(jnp.int32)
    score_ref = logits - jax.nn.logsumexp(logits, axis=0, keepdims=True)

    # tile_b=128 exercises a multi-tile grid with a partial trailing block (no host pad);
    # tile_b=1024 exercises the production-default single-tile clamp path.
    for tile in (128, 1024):
        idx = routeur_forward(x, weight, bias, tile_b=tile)
        jax.block_until_ready(idx)

        assert idx.shape == (B,) and idx.dtype == jnp.int32
        # Hard check: the chosen block attains the per-row maximum (tolerance covers
        # float near-ties between the kernel and reference matmul/softmax paths).
        sel = jnp.take_along_axis(score_ref, idx[:, None], axis=1)[:, 0]
        assert bool(jnp.all(sel >= jnp.max(score_ref, axis=1) - 2e-2)), "argmax mismatch"
        # And (essentially) all rows should match the reference argmax exactly.
        assert float(jnp.mean((idx == ref).astype(jnp.float32))) >= 0.95, (idx, ref)

    print("KERNEL_OK")
</pallas_src>

<mosaic_0001>
module attributes {stable_mosaic.version = 11 : i64} {
  func.func @kernel(%arg0: i32, %arg1: memref<128x256xf32, #tpu.memory_space<vmem>>, %arg2: memref<8x256xf32, #tpu.memory_space<vmem>>, %arg3: memref<2x128xi32, #tpu.memory_space<vmem>>, %arg4: memref<2x8x128xf32, #tpu.memory_space<vmem>>, %arg5: memref<8x1xf32, #tpu.memory_space<vmem>>, %arg6: memref<8x1xf32, #tpu.memory_space<vmem>>) attributes {dimension_semantics = [#tpu.dimension_semantics<arbitrary>], iteration_bounds = array<i64: 2>, scalar_prefetch = 0 : i64, scratch_operands = 3 : i64, tpu.core_type = #tpu.core_type<tc>, window_params = [{transform_indices = @transform_0, window_bounds = array<i64: 128, 256>}, {pipeline_mode = #tpu.pipeline_mode<synchronous>, transform_indices = @transform_1, window_bounds = array<i64: 8, 256>}, {pipeline_mode = #tpu.pipeline_mode<synchronous>, transform_indices = @transform_2, window_bounds = array<i64: 2, 128>}]} {
    %c0_i32 = arith.constant 0 : i32
    %0 = arith.cmpi eq, %arg0, %c0_i32 : i32
    %1 = arith.extui %0 : i1 to i32
    %c0_i32_0 = arith.constant 0 : i32
    %2 = arith.cmpi ne, %1, %c0_i32_0 : i32
    scf.if %2 {
      %cst_20 = arith.constant 0xFF800000 : f32
      %38 = vector.broadcast %cst_20 : f32 to vector<8x1xf32>
      %c0_21 = arith.constant 0 : index
      %c0_22 = arith.constant 0 : index
      %39 = vector.load %arg5[%c0_21, %c0_22] : memref<8x1xf32, #tpu.memory_space<vmem>>, vector<8x1xf32>
      tpu.vector_store %arg5[%c0_21, %c0_22], %38 {strides = array<i32>} : memref<8x1xf32, #tpu.memory_space<vmem>>, vector<8x1xf32>,
      %cst_23 = arith.constant 0.000000e+00 : f32
      %40 = vector.broadcast %cst_23 : f32 to vector<8x1xf32>
      %c0_24 = arith.constant 0 : index
      %c0_25 = arith.constant 0 : index
      %41 = vector.load %arg6[%c0_24, %c0_25] : memref<8x1xf32, #tpu.memory_space<vmem>>, vector<8x1xf32>
      tpu.vector_store %arg6[%c0_24, %c0_25], %40 {strides = array<i32>} : memref<8x1xf32, #tpu.memory_space<vmem>>, vector<8x1xf32>,
    } else {
    }
    %c0 = arith.constant 0 : index
    %c0_1 = arith.constant 0 : index
    %3 = vector.load %arg2[%c0, %c0_1] : memref<8x256xf32, #tpu.memory_space<vmem>>, vector<8x256xf32>
    %c0_2 = arith.constant 0 : index
    %c0_3 = arith.constant 0 : index
    %4 = vector.load %arg1[%c0_2, %c0_3] : memref<128x256xf32, #tpu.memory_space<vmem>>, vector<128x256xf32>
    %cst = arith.constant dense<0.000000e+00> : vector<8x128xf32>
    %5 = tpu.matmul %3, %4, %cst {dimension_numbers = #tpu.dot_dimension_numbers<[1], [1], [0], [0], [0, 0, 1, 0], [], []>} : vector<8x256xf32>, vector<128x256xf32>, vector<8x128xf32> -> vector<8x128xf32>
    %6 = tpu.iota {dimensions = array<i32: 1>} : vector<8x128xi32>
    %c128_i32 = arith.constant 128 : i32
    %7 = arith.muli %arg0, %c128_i32 : i32
    %8 = vector.broadcast %7 : i32 to vector<8x128xi32>
    %9 = arith.addi %6, %8 : vector<8x128xi32>
    %c200_i32 = arith.constant 200 : i32
    %10 = vector.broadcast %c200_i32 : i32 to vector<8x128xi32>
    %11 = arith.cmpi slt, %9, %10 : vector<8x128xi32>
    %cst_4 = arith.constant 0xFF800000 : f32
    %12 = vector.broadcast %cst_4 : f32 to vector<8x128xf32>
    %13 = arith.select %11, %5, %12 : vector<8x128xi1>, vector<8x128xf32>
    %14 = arith.index_cast %arg0 : i32 to index
    %c0_5 = arith.constant 0 : index
    %c0_6 = arith.constant 0 : index
    %15 = vector.load %arg4[%14, %c0_5, %c0_6] : memref<2x8x128xf32, #tpu.memory_space<vmem>>, vector<1x8x128xf32>
    %16 = vector.shape_cast %15 : vector<1x8x128xf32> to vector<8x128xf32>
    %17 = vector.shape_cast %13 : vector<8x128xf32> to vector<1x8x128xf32>
    tpu.vector_store %arg4[%14, %c0_5, %c0_6], %17 {strides = array<i32>} : memref<2x8x128xf32, #tpu.memory_space<vmem>>, vector<1x8x128xf32>,
    %cst_7 = arith.constant dense<0xFF800000> : vector<8xf32>
    %18 = vector.multi_reduction <maximumf>, %13, %cst_7 [1] : vector<8x128xf32> to vector<8xf32>
    %19 = vector.shape_cast %18 : vector<8xf32> to vector<8x1xf32>
    %c0_8 = arith.constant 0 : index
    %c0_9 = arith.constant 0 : index
    %20 = vector.load %arg5[%c0_8, %c0_9] : memref<8x1xf32, #tpu.memory_space<vmem>>, vector<8x1xf32>
    %21 = arith.maximumf %20, %19 : vector<8x1xf32>
    %c0_10 = arith.constant 0 : index
    %c0_11 = arith.constant 0 : index
    %22 = vector.load %arg6[%c0_10, %c0_11] : memref<8x1xf32, #tpu.memory_space<vmem>>, vector<8x1xf32>
    %c0_12 = arith.constant 0 : index
    %c0_13 = arith.constant 0 : index
    %23 = vector.load %arg5[%c0_12, %c0_13] : memref<8x1xf32, #tpu.memory_space<vmem>>, vector<8x1xf32>
    %24 = arith.subf %23, %21 : vector<8x1xf32>
    %25 = math.exp %24 : vector<8x1xf32>
    %26 = arith.mulf %22, %25 : vector<8x1xf32>
    %27 = vector.broadcast %21 : vector<8x1xf32> to vector<8x128xf32>
    %28 = arith.subf %13, %27 : vector<8x128xf32>
    %29 = math.exp %28 : vector<8x128xf32>
    %cst_14 = arith.constant dense<0.000000e+00> : vector<8xf32>
    %30 = vector.multi_reduction <add>, %29, %cst_14 [1] : vector<8x128xf32> to vector<8xf32>
    %31 = vector.shape_cast %30 : vector<8xf32> to vector<8x1xf32>
    %32 = arith.addf %26, %31 : vector<8x1xf32>
    %c0_15 = arith.constant 0 : index
    %c0_16 = arith.constant 0 : index
    %33 = vector.load %arg6[%c0_15, %c0_16] : memref<8x1xf32, #tpu.memory_space<vmem>>, vector<8x1xf32>
    tpu.vector_store %arg6[%c0_15, %c0_16], %32 {strides = array<i32>} : memref<8x1xf32, #tpu.memory_space<vmem>>, vector<8x1xf32>,
    %c0_17 = arith.constant 0 : index
    %c0_18 = arith.constant 0 : index
    %34 = vector.load %arg5[%c0_17, %c0_18] : memref<8x1xf32, #tpu.memory_space<vmem>>, vector<8x1xf32>
    tpu.vector_store %arg5[%c0_17, %c0_18], %21 {strides = array<i32>} : memref<8x1xf32, #tpu.memory_space<vmem>>, vector<8x1xf32>,
    %c1_i32 = arith.constant 1 : i32
    %35 = arith.cmpi eq, %arg0, %c1_i32 : i32
    %36 = arith.extui %35 : i1 to i32
    %c0_i32_19 = arith.constant 0 : i32
    %37 = arith.cmpi ne, %36, %c0_i32_19 : i32
    scf.if %37 {
      %c0_20 = arith.constant 0 : index
      %c0_21 = arith.constant 0 : index
      %38 = vector.load %arg5[%c0_20, %c0_21] : memref<8x1xf32, #tpu.memory_space<vmem>>, vector<8x1xf32>
      %c0_22 = arith.constant 0 : index
      %c0_23 = arith.constant 0 : index
      %39 = vector.load %arg6[%c0_22, %c0_23] : memref<8x1xf32, #tpu.memory_space<vmem>>, vector<8x1xf32>
      %40 = math.log %39 : vector<8x1xf32>
      %41 = arith.addf %38, %40 : vector<8x1xf32>
      %c0_i32_24 = arith.constant 0 : i32
      %c2_i32 = arith.constant 2 : i32
      %42 = arith.addi %c0_i32_24, %c2_i32 : i32
      %c1_i32_25 = arith.constant 1 : i32
      scf.for %arg7 = %c0_i32_24 to %42 step %c1_i32_25  : i32 {
        %43 = arith.index_cast %arg7 : i32 to index
        %c0_27 = arith.constant 0 : index
        %c0_28 = arith.constant 0 : index
        %44 = vector.load %arg4[%43, %c0_27, %c0_28] : memref<2x8x128xf32, #tpu.memory_space<vmem>>, vector<1x8x128xf32>
        %45 = vector.shape_cast %44 : vector<1x8x128xf32> to vector<8x128xf32>
        %46 = vector.broadcast %41 : vector<8x1xf32> to vector<8x128xf32>
        %47 = arith.subf %45, %46 : vector<8x128xf32>
        %cst_29 = arith.constant dense<0xFF800000> : vector<128xf32>
        %48 = vector.multi_reduction <maximumf>, %47, %cst_29 [0] : vector<8x128xf32> to vector<128xf32>
        %49 = vector.shape_cast %48 : vector<128xf32> to vector<1x128xf32>
        %50 = tpu.iota {dimensions = array<i32: 0>} : vector<8x128xi32>
        %51 = vector.broadcast %49 : vector<1x128xf32> to vector<8x128xf32>
        %52 = arith.cmpf oeq, %47, %51 : vector<8x128xf32>
        %c8_i32 = arith.constant 8 : i32
        %53 = vector.broadcast %c8_i32 : i32 to vector<8x128xi32>
        %54 = arith.select %52, %50, %53 : vector<8x128xi1>, vector<8x128xi32>
        %cst_30 = arith.constant dense<2147483647> : vector<128xi32>
        %55 = vector.multi_reduction <minsi>, %54, %cst_30 [0] : vector<8x128xi32> to vector<128xi32>
        %56 = vector.shape_cast %55 : vector<128xi32> to vector<1x128xi32>
        %57 = arith.index_cast %arg7 : i32 to index
        %c0_31 = arith.constant 0 : index
        %58 = vector.load %arg3[%57, %c0_31] : memref<2x128xi32, #tpu.memory_space<vmem>>, vector<1x128xi32>
        tpu.vector_store %arg3[%57, %c0_31], %56 {strides = array<i32>} : memref<2x128xi32, #tpu.memory_space<vmem>>, vector<1x128xi32>,
      }
      %c2_i32_26 = arith.constant 2 : i32
    } else {
    }
    return
  }
  func.func @transform_0(%arg0: i32) -> (i32, i32) {
    %c0_i32 = arith.constant 0 : i32
    %c0_i32_0 = arith.constant 0 : i32
    return %arg0, %c0_i32 : i32, i32
  }
  func.func @transform_1(%arg0: i32) -> (i32, i32) {
    %c0_i32 = arith.constant 0 : i32
    %c0_i32_0 = arith.constant 0 : i32
    %c0_i32_1 = arith.constant 0 : i32
    return %c0_i32, %c0_i32_0 : i32, i32
  }
  func.func @transform_2(%arg0: i32) -> (i32, i32) {
    %c0_i32 = arith.constant 0 : i32
    %c0_i32_0 = arith.constant 0 : i32
    %c0_i32_1 = arith.constant 0 : i32
    return %c0_i32, %c0_i32_0 : i32, i32
  }
}

</mosaic_0001>

<llo_original>
// kernel: routeur_forward.1
$region0: #{routeur_forward.1}
  #allocation0 [shape = 'u32[]', space=smem, size = 0x4, offset = 0x4, fixed_abs, tag = 'smem constant byte address 0x4 - core index']
  #allocation1 [shape = 'u32[144,128]{1,0:T(1,128)}', space=vmem, size = 0x12000, scoped, tag = 'internal scratch']
  #allocation2 [shape = 'f32[2,8,128]{2,1,0:T(8,128)}', space=vmem, size = 0x2000, scoped, tag = 'scratch operand']
  #allocation3 [shape = 'f32[8,1]{1,0:T(8,128)}', space=vmem, size = 0x1000, scoped, tag = 'scratch operand']
  #allocation4 [shape = 'f32[8,1]{1,0:T(8,128)}', space=vmem, size = 0x1000, scoped, tag = 'scratch operand']
  %s0 = inlined_call_operand.vmem [shape: f32[200,256], index: 0, kind: input, shape index: {}]
  %s1 = inlined_call_operand.vmem [shape: f32[8,256], index: 1, kind: input, shape index: {}]
  %s2 = inlined_call_operand.hbm [shape: s32[2,128], index: 2, kind: output, shape index: {}]
  %s3 = sld [smem:[#allocation0]]
  $region56: #{routeur_forward.1} parent=0
    _
  %s5 = ssub.s32 1, %s3
  %s6 = scalar_select 0, %s5, %s3
  $region1: #{routeur_forward.1} parent=0
    #allocation5 [shape = 'u8[1024]{0}', space=vmem, size = 0x400, scoped, tag = 'output window, operand 0, single buffered']
    #allocation6 [shape = 's32[2]{0}', space=sflag, size = 0x8, scoped, tag = 'scoped memory for routeur_forward.1']
    %7 = vsyncpa [#allocation6], 0
    loop: start=0, step=1, limit=4
    $region2: #{routeur_forward.1} parent=1 // loop_pre_header
      _
    $region3: #{routeur_forward.1} parent=1 // loop_header
      %s9 = sphi 0, %s13
      %p10 = scmp.ge.s32.totalorder %s9, 4
      %s19 = sphi 0, %s21
      %s22 = sphi 0, %s19
      %s23 = sphi 0, %s22
      %s39 = sphi 0, %s23
      %s43 = sphi 0, %s43
      %s45 = sphi 0, %s43
      %s46 = sphi 0, %s45
      %s60 = sphi 0, %s46
      %s64 = sphi 0, %s64
      %s66 = sphi 0, %s64
      %s67 = sphi 0, %s66
      %s81 = sphi 0, %s67
    $region4: #{routeur_forward.1} parent=1 // loop_header_branch
      %12 = sbr.rel (%p10) target = $region8
    $region5: #{routeur_forward.1} parent=1 // loop_body
      %s14 = ssub.s32 %s9, 1
      %s15 = ssub.s32 %s9, 2
      %s16 = sadd.s32 %s9, 1
      %s17 = ssub.s32 %s9, %s16
      %p18 = scmp.eq.s32.totalorder %s17, 0
      %s20 = sadd.s32 %s19, 1
      %s21 = scalar_select %p18, %s19, %s20
      %p24 = pneg %p18
      %p25 = scmp.eq.s32.totalorder %s9, 1
      %p26 = por %p24, %p25
      %p27 = scmp.ne.s32.totalorder %s19, %s22
      %p28 = scmp.eq.s32.totalorder %s9, 0
      %p29 = por %p27, %p28
      %p30 = scmp.ne.s32.totalorder %s19, %s22
      %p31 = scmp.eq.s32.totalorder %s14, 1
      %p32 = por %p30, %p31
      %p33 = scmp.ne.s32.totalorder %s22, %s23
      %p34 = scmp.eq.s32.totalorder %s14, 0
      %p35 = por %p33, %p34
      %p36 = scmp.ne.s32.totalorder %s22, %s23
      %p37 = scmp.eq.s32.totalorder %s15, 1
      %p38 = por %p36, %p37
      %p40 = scmp.ne.s32.totalorder %s23, %s39
      %p41 = scmp.eq.s32.totalorder %s15, 0
      %p42 = por %p40, %p41
      %s44 = sadd.s32 %s43, 1
      %p47 = scmp.eq.s32.totalorder %s9, 1
      %p48 = scmp.ne.s32.totalorder %s43, %s45
      %p49 = scmp.eq.s32.totalorder %s9, 0
      %p50 = por %p48, %p49
      %p51 = scmp.ne.s32.totalorder %s43, %s45
      %p52 = scmp.eq.s32.totalorder %s14, 1
      %p53 = por %p51, %p52
      %p54 = scmp.ne.s32.totalorder %s45, %s46
      %p55 = scmp.eq.s32.totalorder %s14, 0
      %p56 = por %p54, %p55
      %p57 = scmp.ne.s32.totalorder %s45, %s46
      %p58 = scmp.eq.s32.totalorder %s15, 1
      %p59 = por %p57, %p58
      %p61 = scmp.ne.s32.totalorder %s46, %s60
      %p62 = scmp.eq.s32.totalorder %s15, 0
      %p63 = por %p61, %p62
      %s65 = sadd.s32 %s64, 1
      %p68 = scmp.eq.s32.totalorder %s9, 1
      %p69 = scmp.ne.s32.totalorder %s64, %s66
      %p70 = scmp.eq.s32.totalorder %s9, 0
      %p71 = por %p69, %p70
      %p72 = scmp.ne.s32.totalorder %s64, %s66
      %p73 = scmp.eq.s32.totalorder %s14, 1
      %p74 = por %p72, %p73
      %p75 = scmp.ne.s32.totalorder %s66, %s67
      %p76 = scmp.eq.s32.totalorder %s14, 0
      %p77 = por %p75, %p76
      %p78 = scmp.ne.s32.totalorder %s66, %s67
      %p79 = scmp.eq.s32.totalorder %s15, 1
      %p80 = por %p78, %p79
      %p82 = scmp.ne.s32.totalorder %s67, %s81
      %p83 = scmp.eq.s32.totalorder %s15, 0
      %p84 = por %p82, %p83
      %p85 = scmp.le.s32.totalorder 1, %s9
      %p86 = scmp.lt.s32.totalorder %s9, 3
      %p87 = pnand %p85, %p86
      %p88 = pneg %p87
      // Predicated region
      $region9: #{routeur_forward.1} parent=5 // pred_check
        _
      $region10: #{routeur_forward.1} parent=5 // pred_check_branch
        %90 = sbr.rel (%p87) target = $region12
      $region11: #{routeur_forward.1} parent=5 // pred_region
        %s91 = ssub.s32 %s9, 1
        // Predicated region
        $region13: #{routeur_forward.1} parent=11 // pred_check
          %p92 = pneg %p56
        $region14: #{routeur_forward.1} parent=11 // pred_check_branch
          %94 = sbr.rel (%p92) target = $region16
        $region15: #{routeur_forward.1} parent=11 // pred_region
          _
        $region16: #{routeur_forward.1} parent=11 // pred_fallthru
          _
      $region12: #{routeur_forward.1} parent=5 // pred_fallthru
        _
      %p95 = scmp.lt.s32.totalorder %s9, 2
      // Predicated region
      $region17: #{routeur_forward.1} parent=5 // pred_check
        %p96 = pneg %p95
      $region18: #{routeur_forward.1} parent=5 // pred_check_branch
        %98 = sbr.rel (%p96) target = $region20
      $region19: #{routeur_forward.1} parent=5 // pred_region
        // Predicated region
        $region21: #{routeur_forward.1} parent=19 // pred_check
          %p99 = pneg %p29
        $region22: #{routeur_forward.1} parent=19 // pred_check_branch
          %101 = sbr.rel (%p99) target = $region24
        $region23: #{routeur_forward.1} parent=19 // pred_region
          %s102 = smul.u32 16, %s9
          %s103 = ssub.s32 25, %s102
          %p104 = scmp.lt.s32.totalorder %s103, 16
          %s105 = scalar_select %p104, %s103, 16
          %s106 = smul.u32 128, %s105
          %s107 = smul.u32 %s106, 2
          %p108 = scmp.lt.s32.totalorder %s102, 24
          %s109 = scalar_select %p108, %s102, 24
          %s110 = smul.addr %s109, 2
          %s111 = smul.addr %s110, 8
          %s112 = scalar_lea.vmem %s0, %s111
          %s113 = smul.u32 16, %s9
          %s114 = ssub.s32 25, %s113
          %p115 = scmp.lt.s32.totalorder %s114, 16
          %s116 = scalar_select %p115, %s114, 16
          %s117 = smul.u32 128, %s116
          %s118 = smul.u32 %s117, 2
        $region24: #{routeur_forward.1} parent=19 // pred_fallthru
          _
      $region20: #{routeur_forward.1} parent=5 // pred_fallthru
        _
      %p119 = scmp.le.s32.totalorder 1, %s9
      %p120 = scmp.lt.s32.totalorder %s9, 3
      %p121 = pnand %p119, %p120
      %p122 = pneg %p121
      // Predicated region
      $region25: #{routeur_forward.1} parent=5 // pred_check
        _
      $region26: #{routeur_forward.1} parent=5 // pred_check_branch
        %124 = sbr.rel (%p121) target = $region28
      $region27: #{routeur_forward.1} parent=5 // pred_region
        %s125 = ssub.s32 %s9, 1
        %s126 = smul.u32 16, %s14
        %s127 = ssub.s32 25, %s126
        %p128 = scmp.lt.s32.totalorder %s127, 16
        %s129 = scalar_select %p128, %s127, 16
        %s130 = smul.u32 128, %s129
        %s131 = smul.u32 %s130, 2
        %p132 = scmp.lt.s32.totalorder %s126, 24
        %s133 = scalar_select %p132, %s126, 24
        %s134 = smul.addr %s133, 2
        %s135 = smul.addr %s134, 8
        %s136 = scalar_lea.vmem %s0, %s135
        %p137 = pneg %p35
        %p138 = pneg %p32
        %p139 = pneg %p56
        %p140 = pneg %p53
        %p141 = pneg %p77
        %p142 = pneg %p74
        %s143 = smul.u32 16, %s14
        %s144 = ssub.s32 25, %s143
        %p145 = scmp.lt.s32.totalorder %s144, 16
        %s146 = scalar_select %p145, %s144, 16
        %s147 = smul.u32 128, %s146
        %s148 = smul.u32 %s147, 2
        %p149 = scmp.lt.s32.totalorder %s143, 24
        %s150 = scalar_select %p149, %s143, 24
        %s151 = smul.addr %s150, 2
        %s152 = smul.addr %s151, 8
        %s153 = scalar_lea.vmem %s0, %s152
        %s154 = smul.u32 16, %s14
        %s155 = ssub.s32 25, %s154
        %p156 = scmp.lt.s32.totalorder %s155, 16
        %s157 = scalar_select %p156, %s155, 16
        %s158 = smul.u32 128, %s157
        %s159 = smul.u32 %s158, 2
        %p160 = scmp.eq.s32.totalorder %s14, 0
        // Predicated region
        $region29: #{routeur_forward.1} parent=27 // pred_check
          %p161 = pneg %p160
        $region30: #{routeur_forward.1} parent=27 // pred_check_branch
          %163 = sbr.rel (%p161) target = $region32
        $region31: #{routeur_forward.1} parent=27 // pred_region
          %vm164 = vcmask 7168
          %165 = vst.msk [vmem:[#allocation3] sm:$0xff] %vm164, -inf
          %166 = vst.msk [vmem:[#allocation4] sm:$0xff] %vm164, 0.0
        $region32: #{routeur_forward.1} parent=27 // pred_fallthru
          _
        %v167 = vld [vmem:[%s1] sm:$0xff]
        %v168 = vld [vmem:[%s1 + $0x8] sm:$0xff]
        %v169 = vld [vmem:[%s153] sm:$0xff]
        %v170 = vld [vmem:[%s153 + $0x8] sm:$0xff]
        %v171 = vld [vmem:[%s153 + $0x10] sm:$0xff]
        %v172 = vld [vmem:[%s153 + $0x18] sm:$0xff]
        %v173 = vld [vmem:[%s153 + $0x20] sm:$0xff]
        %v174 = vld [vmem:[%s153 + $0x28] sm:$0xff]
        %v175 = vld [vmem:[%s153 + $0x30] sm:$0xff]
        %v176 = vld [vmem:[%s153 + $0x38] sm:$0xff]
        %v177 = vld [vmem:[%s153 + $0x40] sm:$0xff]
        %v178 = vld [vmem:[%s153 + $0x48] sm:$0xff]
        %v179 = vld [vmem:[%s153 + $0x50] sm:$0xff]
        %v180 = vld [vmem:[%s153 + $0x58] sm:$0xff]
        %v181 = vld [vmem:[%s153 + $0x60] sm:$0xff]
        %v182 = vld [vmem:[%s153 + $0x68] sm:$0xff]
        %v183 = vld [vmem:[%s153 + $0x70] sm:$0xff]
        %v184 = vld [vmem:[%s153 + $0x78] sm:$0xff]
        %v185 = vld [vmem:[%s153 + $0x80] sm:$0xff]
        %v186 = vld [vmem:[%s153 + $0x88] sm:$0xff]
        %v187 = vld [vmem:[%s153 + $0x90] sm:$0xff]
        %v188 = vld [vmem:[%s153 + $0x98] sm:$0xff]
        %v189 = vld [vmem:[%s153 + $0xa0] sm:$0xff]
        %v190 = vld [vmem:[%s153 + $0xa8] sm:$0xff]
        %v191 = vld [vmem:[%s153 + $0xb0] sm:$0xff]
        %v192 = vld [vmem:[%s153 + $0xb8] sm:$0xff]
        %v193 = vld [vmem:[%s153 + $0xc0] sm:$0xff]
        %v194 = vld [vmem:[%s153 + $0xc8] sm:$0xff]
        %v195 = vld [vmem:[%s153 + $0xd0] sm:$0xff]
        %v196 = vld [vmem:[%s153 + $0xd8] sm:$0xff]
        %v197 = vld [vmem:[%s153 + $0xe0] sm:$0xff]
        %v198 = vld [vmem:[%s153 + $0xe8] sm:$0xff]
        %v199 = vld [vmem:[%s153 + $0xf0] sm:$0xff]
        %v200 = vld [vmem:[%s153 + $0xf8] sm:$0xff]
        %201 = vmatprep.subr.mxu0 %v170
        %202 = vmatpush1.xpose.msra.mxu0 %v169
        %203 = vmatprep.subr.mxu0 %v172
        %204 = vmatpush1.xpose.msra.mxu0 %v171
        %205 = vmatprep.subr.mxu0 %v174
        %206 = vmatpush1.xpose.msra.mxu0 %v173
        %207 = vmatprep.subr.mxu0 %v176
        %208 = vmatpush1.xpose.msra.mxu0 %v175
        %209 = vmatprep.subr.mxu0 %v178
        %210 = vmatpush1.xpose.msra.mxu0 %v177
        %211 = vmatprep.subr.mxu0 %v180
        %212 = vmatpush1.xpose.msra.mxu0 %v179
        %213 = vmatprep.subr.mxu0 %v182
        %214 = vmatpush1.xpose.msra.mxu0 %v181
        %215 = vmatprep.subr.mxu0 %v184
        %216 = vmatpush1.xpose.msra.mxu0 %v183
        %217 = vmatprep.subr.mxu0 %v186
        %218 = vmatpush1.xpose.msra.mxu0 %v185
        %219 = vmatprep.subr.mxu0 %v188
        %220 = vmatpush1.xpose.msra.mxu0 %v187
        %221 = vmatprep.subr.mxu0 %v190
        %222 = vmatpush1.xpose.msra.mxu0 %v189
        %223 = vmatprep.subr.mxu0 %v192
        %224 = vmatpush1.xpose.msra.mxu0 %v191
        %225 = vmatprep.subr.mxu0 %v194
        %226 = vmatpush1.xpose.msra.mxu0 %v193
        %227 = vmatprep.subr.mxu0 %v196
        %228 = vmatpush1.xpose.msra.mxu0 %v195
        %229 = vmatprep.subr.mxu0 %v198
        %230 = vmatpush1.xpose.msra.mxu0 %v197
        %231 = vmatprep.subr.mxu0 %v200
        %232 = vmatpush1.xpose.msra.mxu0 %v199
        %233 = vmatprep.subr.mxu0 0.0
        %234 = vmatpush1.xpose.msra.mxu0 0.0
        %235 = vmatprep.subr.mxu0 0.0
        %236 = vmatpush1.xpose.msra.mxu0 0.0
        %237 = vmatprep.subr.mxu0 0.0
        %238 = vmatpush1.xpose.msra.mxu0 0.0
        %239 = vmatprep.subr.mxu0 0.0
        %240 = vmatpush1.xpose.msra.mxu0 0.0
        %241 = vmatprep.subr.mxu0 0.0
        %242 = vmatpush1.xpose.msra.mxu0 0.0
        %243 = vmatprep.subr.mxu0 0.0
        %244 = vmatpush1.xpose.msra.mxu0 0.0
        %245 = vmatprep.subr.mxu0 0.0
        %246 = vmatpush1.xpose.msra.mxu0 0.0
        %247 = vmatprep.subr.mxu0 0.0
        %248 = vmatpush1.xpose.msra.mxu0 0.0
        %249 = vmatprep.subr.mxu0 0.0
        %250 = vmatpush1.xpose.msra.mxu0 0.0
        %251 = vmatprep.subr.mxu0 0.0
        %252 = vmatpush1.xpose.msra.mxu0 0.0
        %253 = vmatprep.subr.mxu0 0.0
        %254 = vmatpush1.xpose.msra.mxu0 0.0
        %255 = vmatprep.subr.mxu0 0.0
        %256 = vmatpush1.xpose.msra.mxu0 0.0
        %257 = vmatprep.subr.mxu0 0.0
        %258 = vmatpush1.xpose.msra.mxu0 0.0
        %259 = vmatprep.subr.mxu0 0.0
        %260 = vmatpush1.xpose.msra.mxu0 0.0
        %261 = vmatprep.subr.mxu0 0.0
        %262 = vmatpush1.xpose.msra.mxu0 0.0
        %263 = vmatprep.subr.mxu0 0.0
        %264 = vmatpush1.xpose.msra.mxu0 0.0
        %265 = vmatprep.mubr.f32.mxu0 %v168
        %266 = vmatmul.mubr.f32.gmra.mrb[0].mxu0 %v167
        %v267 = vpop.f32.mrb[0].mxu0
        %v268 = vadd.f32 0.0, %v267
        %v269 = vpop.f32.mrb[0].mxu0
        %270 = vdwg.mxu0
        %v271 = vlaneseq
        %v272 = vand.u32 %v271, 127
        %s273 = smul.u32 %s14, 128
        %v274 = vstv %s273
        %v275 = vadd.s32 %v272, %v274
        %vm276 = vcmp.lt.s32.totalorder %v275, 200
        %v277 = vsel %vm276, %v268, -inf
        %s278 = smul.u32 %s14, 8
        %s279 = scalar_lea.vmem [#allocation2], %s278
        %280 = vst [vmem:[%s279] sm:$0xff] %v277
        %281 = vmax.xlane.f32.xlu0 %v277
        %v282 = vpop.xlane.xlu0 %281
        %v283 = vld [vmem:[#allocation3] sm:$0xff]
        %v284 = vmax.f32 %v283, %v282
        %v285 = vld [vmem:[#allocation4] sm:$0xff]
        %v286 = vsub.f32 %v283, %v284
        %v287 = vmul.f32 %v286, 1.442695
        %v288 = vpow.pop %v287
        %v289 = vmul.f32 %v285, %v288
        %291 = vset.pattern.permute.xlu0 0
        %292 = vperm.xlu0 %291, %v284
        %v293 = vpop.permute.xlu0 %292
        %v295 = vsub.f32 %v277, %v293
        %v296 = vmul.f32 %v295, 1.442695
        %v297 = vpow.pop %v296
        %298 = vadd.xlane.f32.xlu0 %v297
        %v299 = vpop.xlane.xlu0 %298
        %v300 = vadd.f32 %v289, %v299
        %vm301 = vcmask 7168
        %302 = vst.msk [vmem:[#allocation4] sm:$0xff] %vm301, %v300
        %303 = vst.msk [vmem:[#allocation3] sm:$0xff] %vm301, %v284
        %p304 = scmp.eq.s32.totalorder %s14, 1
        // Predicated region
        $region33: #{routeur_forward.1} parent=27 // pred_check
          %p305 = pneg %p304
        $region34: #{routeur_forward.1} parent=27 // pred_check_branch
          %307 = sbr.rel (%p305) target = $region36
        $region35: #{routeur_forward.1} parent=27 // pred_region
          %v308 = vld [vmem:[#allocation3] sm:$0xff]
          %v309 = vld [vmem:[#allocation4] sm:$0xff]
          %v310 = vlog2.pop %v309
          %v311 = vmul.f32 %v310, 0.6931472
          %v312 = vadd.f32 %v308, %v311
          loop: start=0, step=1, limit=2
          $region37: #{routeur_forward.1} parent=35 // loop_pre_header
            _
          $region38: #{routeur_forward.1} parent=35 // loop_header
            %s314 = sphi 0, %s318
            %p315 = scmp.ge.s32.totalorder %s314, 2
          $region39: #{routeur_forward.1} parent=35 // loop_header_branch
            %317 = sbr.rel (%p315) target = $region43
          $region40: #{routeur_forward.1} parent=35 // loop_body
            %s319 = smul.u32 %s314, 8
            %s320 = scalar_lea.vmem [#allocation2], %s319
            %v321 = vld [vmem:[%s320] sm:$0xff]
            %323 = vset.pattern.permute.xlu0 0
            %324 = vperm.xlu0 %323, %v312
            %v325 = vpop.permute.xlu0 %324
            %v327 = vsub.f32 %v321, %v325
            %v328 = vrot.slane %v327, 4
            %v329 = vmax.f32 %v327, %v328
            %v330 = vrot.slane %v329, 2
            %v331 = vmax.f32 %v329, %v330
            %v332 = vrot.slane %v331, 1
            %v333 = vmax.f32 %v331, %v332
            %v334 = vlaneseq
            %v335 = vshrl.u32 %v334, 7
            %vm336 = vcmp.eq.f32.partialorder %v327, %v333
            %v337 = vsel %vm336, %v335, 8
            %v338 = vrot.slane %v337, 4
            %vm339 = vcmp.lt.s32.totalorder %v337, %v338
            %v340 = vsel %vm339, %v337, %v338
            %v341 = vrot.slane %v340, 2
            %vm342 = vcmp.lt.s32.totalorder %v340, %v341
            %v343 = vsel %vm342, %v340, %v341
            %v344 = vrot.slane %v343, 1
            %vm345 = vcmp.lt.s32.totalorder %v343, %v344
            %v346 = vsel %vm345, %v343, %v344
            %s347 = scalar_lea.vmem [#allocation5], %s314
            %348 = vst [vmem:[%s347] sm:$0x1] %v346
          $region41: #{routeur_forward.1} parent=35 // loop_footer
            %s318 = sadd.s32 1, %s314
          $region42: #{routeur_forward.1} parent=35 // loop_footer_branch
            %313 = sbr.rel target = $region38
          $region43: #{routeur_forward.1} parent=35 // loop_exit
            _
        $region36: #{routeur_forward.1} parent=27 // pred_fallthru
          _
        // Predicated region
        $region44: #{routeur_forward.1} parent=27 // pred_check
          %p349 = pneg %p74
        $region45: #{routeur_forward.1} parent=27 // pred_check_branch
          %351 = sbr.rel (%p349) target = $region47
        $region46: #{routeur_forward.1} parent=27 // pred_region
          %s353 = ssub.s32 32, 32
          %354 = vsyncadd [#allocation6], %s353
          %s356 = sshll.u32 [#allocation5], 4
          %s357 = int_to_ptr.vmem [resolvable:$true] %s356
          %359 = dma.vmem_to_hbm [thread:$0]  %s357, 32, %s2, [#allocation6]
        $region47: #{routeur_forward.1} parent=27 // pred_fallthru
          _
        // Predicated region
        $region48: #{routeur_forward.1} parent=27 // pred_check
          %p360 = pneg %p74
        $region49: #{routeur_forward.1} parent=27 // pred_check_branch
          %362 = sbr.rel (%p360) target = $region51
        $region50: #{routeur_forward.1} parent=27 // pred_region
          %363 = dma.done [#allocation6], 32
        $region51: #{routeur_forward.1} parent=27 // pred_fallthru
          _
      $region28: #{routeur_forward.1} parent=5 // pred_fallthru
        _
      %p364 = scmp.le.s32.totalorder 2, %s9
      // Predicated region
      $region52: #{routeur_forward.1} parent=5 // pred_check
        %p365 = pneg %p364
      $region53: #{routeur_forward.1} parent=5 // pred_check_branch
        %367 = sbr.rel (%p365) target = $region55
      $region54: #{routeur_forward.1} parent=5 // pred_region
        %s368 = ssub.s32 %s9, 2
      $region55: #{routeur_forward.1} parent=5 // pred_fallthru
        _
    $region6: #{routeur_forward.1} parent=1 // loop_footer
      %s13 = sadd.s32 1, %s9
    $region7: #{routeur_forward.1} parent=1 // loop_footer_branch
      %8 = sbr.rel target = $region3
    $region8: #{routeur_forward.1} parent=1 // loop_exit
      _
    %369 = vsyncpa [#allocation6], 1
    %s370 = scalar_lea.sflag [#allocation6], 1
    %371 = vsyncpa %s370, 1

</llo_original>
